<compile_context>
chip_gen: v7x
topology: tpu7x:2x2x1
jax: 0.10.0
libtpu: 0.0.40
codegen_flags: <defaults>
</compile_context>

<pallas_src>
import functools

import jax
import jax.numpy as jnp
from jax.experimental import pallas as pl
from jax.experimental.pallas import tpu as pltpu


def _focal_loss_kernel(x_ref, t_ref, o_ref, *, gamma, n_rows, block_rows,
                       assume_binary_targets, mask_rows):
    x = x_ref[...].astype(jnp.float32)
    t = t_ref[...].astype(jnp.float32)

    # softplus(-|x|) = log1p(exp(-|x|))   (shared sub-expression)
    sp_neg_abs_x = jnp.log1p(jnp.exp(-jnp.abs(x)))

    # Stable BCE-with-logits:
    #   x - x*t + max(-x,0) + log(exp(-max)+exp(-x-max)) == max(x,0) - x*t + softplus(-|x|)
    loss = jnp.maximum(x, 0.0) - x * t + sp_neg_abs_x

    # invprobs = logsigmoid(-x * (2t - 1)) = min(z,0) - log1p(exp(-|z|))
    z = -x * (t * 2.0 - 1.0)
    if assume_binary_targets:
        # For t in {0,1}: |z| == |x|, so reuse softplus(-|x|) computed above.
        invprobs = jnp.minimum(z, 0.0) - sp_neg_abs_x
    else:
        invprobs = jnp.minimum(z, 0.0) - jnp.log1p(jnp.exp(-jnp.abs(z)))

    loss = jnp.exp(invprobs * gamma) * loss

    if mask_rows:
        # Zero out rows of the (padded) last tile that fall beyond the batch.
        row = (pl.program_id(0) * block_rows
               + jax.lax.broadcasted_iota(jnp.int32, (loss.shape[0], 1), 0))
        loss = jnp.where(row < n_rows, loss, 0.0)

    # One full-tile reduction; broadcast the scalar into a lane-dense,
    # (8,128)-aligned output block owned by this grid step.
    partial = jnp.sum(loss)
    o_ref[...] = jnp.full((8, 128), partial, dtype=jnp.float32)


def _pick_block_rows(n_rows, n_cols):
    # Keep 2 inputs x 2 pipeline buffers x TB x C x 4B comfortably under the
    # smallest default scoped-VMEM budget (16 MiB on v5e, 32 MiB v6e/v7x):
    # TB * C <= 2^20 f32 elements  =>  <= 4 MiB per buffer, ~16 MiB total.
    max_rows = max(8, (1 << 20) // max(n_cols, 1))
    tb = min(1024, max_rows)
    tb = max(8, (tb // 8) * 8)
    if n_rows <= tb:
        return n_rows  # single tile covering the full array (always legal)
    return tb


def focal_loss(inputs, targets, gamma=2.0, *, assume_binary_targets=False,
               block_rows=None):
    if inputs.shape != targets.shape:
        raise ValueError(
            "Target size ({}) must be the same as input size ({})".format(
                targets.shape, inputs.shape))
    if inputs.ndim != 2:
        raise ValueError("focal_loss expects (batch, num_classes) inputs")

    B, C = inputs.shape
    tb = _pick_block_rows(B, C) if block_rows is None else min(int(block_rows), B)
    num_tiles = pl.cdiv(B, tb)
    mask_rows = (B % tb) != 0

    n_trans = (3 if assume_binary_targets else 5) * B * C
    bytes_accessed = (B * C * (inputs.dtype.itemsize + targets.dtype.itemsize)
                      + num_tiles * 8 * 128 * 4)

    partials = pl.pallas_call(
        functools.partial(
            _focal_loss_kernel, gamma=float(gamma), n_rows=B, block_rows=tb,
            assume_binary_targets=assume_binary_targets, mask_rows=mask_rows),
        out_shape=jax.ShapeDtypeStruct((num_tiles * 8, 128), jnp.float32),
        grid=(num_tiles,),
        in_specs=[pl.BlockSpec((tb, C), lambda i: (i, 0)),
                  pl.BlockSpec((tb, C), lambda i: (i, 0))],
        out_specs=pl.BlockSpec((8, 128), lambda i: (i, 0)),
        compiler_params=pltpu.CompilerParams(
            dimension_semantics=("parallel",),
            vmem_limit_bytes=32 * 1024 * 1024),
        cost_estimate=pl.CostEstimate(
            flops=14 * B * C,
            transcendentals=n_trans,
            bytes_accessed=bytes_accessed),
    )(inputs, targets)

    # Tiny cross-tile reduction + mean normalization done once in JAX.
    tile_sums = partials[::8, 0]                      # (num_tiles,)
    return jnp.sum(tile_sums) / jnp.float32(B)


def focal_loss_ref(inputs, targets, gamma=2.0):
    # Pure-JAX reference mirroring the PyTorch forward literally.
    x = inputs.astype(jnp.float32)
    t = targets.astype(jnp.float32)
    max_val = jnp.clip(-x, 0.0, None)
    loss = x - x * t + max_val + jnp.log(jnp.exp(-max_val) + jnp.exp(-x - max_val))
    z = -x * (t * 2.0 - 1.0)
    invprobs = jnp.minimum(z, 0.0) - jnp.log1p(jnp.exp(-jnp.abs(z)))
    loss = jnp.exp(invprobs * gamma) * loss
    return jnp.mean(jnp.sum(loss, axis=1))


if __name__ == "__main__":
    key = jax.random.PRNGKey(0)
    k1, k2, k3, k4 = jax.random.split(key, 4)

    # Case 1: small, (8,128)-aligned multi-label batch (batch, num_classes).
    B1, C1 = 8, 128
    logits1 = jax.random.normal(k1, (B1, C1), dtype=jnp.float32) * 2.0
    targets1 = jax.random.bernoulli(k2, p=0.3, shape=(B1, C1)).astype(jnp.float32)

    out1 = jax.block_until_ready(focal_loss(logits1, targets1, gamma=2.0))
    ref1 = focal_loss_ref(logits1, targets1, gamma=2.0)
    assert jnp.allclose(out1, ref1, rtol=1e-5, atol=1e-5), (out1, ref1)

    # Binary-target fast path (3 transcendentals/elem): identical for {0,1} labels.
    out1b = jax.block_until_ready(
        focal_loss(logits1, targets1, gamma=2.0, assume_binary_targets=True))
    assert jnp.allclose(out1b, ref1, rtol=1e-5, atol=1e-5), (out1b, ref1)

    # Case 2: unaligned shape, soft labels, forced multi-tile grid — exercises
    # the ragged-last-tile mask and the general logsigmoid path.
    B2, C2 = 300, 96
    logits2 = jax.random.normal(k3, (B2, C2), dtype=jnp.float32)
    targets2 = jax.random.uniform(k4, (B2, C2), dtype=jnp.float32)
    out2 = jax.block_until_ready(
        focal_loss(logits2, targets2, gamma=2.0, block_rows=64))
    ref2 = focal_loss_ref(logits2, targets2, gamma=2.0)
    assert jnp.allclose(out2, ref2, rtol=1e-4, atol=1e-4), (out2, ref2)

    print("KERNEL_OK")
</pallas_src>

<mosaic_0001>
module attributes {stable_mosaic.version = 11 : i64} {
  func.func @_focal_loss_kernel(%arg0: i32, %arg1: memref<8x128xf32, #tpu.memory_space<vmem>>, %arg2: memref<8x128xf32, #tpu.memory_space<vmem>>, %arg3: memref<8x128xf32, #tpu.memory_space<vmem>>) attributes {dimension_semantics = [#tpu.dimension_semantics<parallel>], iteration_bounds = array<i64: 1>, scalar_prefetch = 0 : i64, scratch_operands = 0 : i64, tpu.core_type = #tpu.core_type<tc>, window_params = [{transform_indices = @transform_0, window_bounds = array<i64: 8, 128>}, {transform_indices = @transform_1, window_bounds = array<i64: 8, 128>}, {transform_indices = @transform_2, window_bounds = array<i64: 8, 128>}]} {
    %c0 = arith.constant 0 : index
    %c0_0 = arith.constant 0 : index
    %0 = vector.load %arg1[%c0, %c0_0] : memref<8x128xf32, #tpu.memory_space<vmem>>, vector<8x128xf32>
    %c0_1 = arith.constant 0 : index
    %c0_2 = arith.constant 0 : index
    %1 = vector.load %arg2[%c0_1, %c0_2] : memref<8x128xf32, #tpu.memory_space<vmem>>, vector<8x128xf32>
    %2 = math.absf %0 : vector<8x128xf32>
    %cst = arith.constant 0.000000e+00 : f32
    %3 = vector.broadcast %cst : f32 to vector<8x128xf32>
    %4 = arith.subf %3, %2 : vector<8x128xf32>
    %5 = math.exp %4 : vector<8x128xf32>
    %6 = math.log1p %5 : vector<8x128xf32>
    %cst_3 = arith.constant 0.000000e+00 : f32
    %7 = vector.broadcast %cst_3 : f32 to vector<8x128xf32>
    %8 = arith.maximumf %0, %7 : vector<8x128xf32>
    %9 = arith.mulf %0, %1 : vector<8x128xf32>
    %10 = arith.subf %8, %9 : vector<8x128xf32>
    %11 = arith.addf %10, %6 : vector<8x128xf32>
    %cst_4 = arith.constant 0.000000e+00 : f32
    %12 = vector.broadcast %cst_4 : f32 to vector<8x128xf32>
    %13 = arith.subf %12, %0 : vector<8x128xf32>
    %cst_5 = arith.constant 2.000000e+00 : f32
    %14 = vector.broadcast %cst_5 : f32 to vector<8x128xf32>
    %15 = arith.mulf %1, %14 : vector<8x128xf32>
    %cst_6 = arith.constant 1.000000e+00 : f32
    %16 = vector.broadcast %cst_6 : f32 to vector<8x128xf32>
    %17 = arith.subf %15, %16 : vector<8x128xf32>
    %18 = arith.mulf %13, %17 : vector<8x128xf32>
    %cst_7 = arith.constant 0.000000e+00 : f32
    %19 = vector.broadcast %cst_7 : f32 to vector<8x128xf32>
    %20 = arith.minimumf %18, %19 : vector<8x128xf32>
    %21 = math.absf %18 : vector<8x128xf32>
    %cst_8 = arith.constant 0.000000e+00 : f32
    %22 = vector.broadcast %cst_8 : f32 to vector<8x128xf32>
    %23 = arith.subf %22, %21 : vector<8x128xf32>
    %24 = math.exp %23 : vector<8x128xf32>
    %25 = math.log1p %24 : vector<8x128xf32>
    %26 = arith.subf %20, %25 : vector<8x128xf32>
    %cst_9 = arith.constant 2.000000e+00 : f32
    %27 = vector.broadcast %cst_9 : f32 to vector<8x128xf32>
    %28 = arith.mulf %26, %27 : vector<8x128xf32>
    %29 = math.exp %28 : vector<8x128xf32>
    %30 = arith.mulf %29, %11 : vector<8x128xf32>
    %31 = vector.shape_cast %30 : vector<8x128xf32> to vector<1x8x128xf32>
    %cst_10 = arith.constant dense<0.000000e+00> : vector<1xf32>
    %32 = vector.multi_reduction <add>, %31, %cst_10 [1, 2] : vector<1x8x128xf32> to vector<1xf32>
    %33 = vector.shape_cast %32 : vector<1xf32> to vector<1x1x1xf32>
    %34 = vector.extract %33[0, 0, 0] : f32 from vector<1x1x1xf32>
    %35 = vector.broadcast %34 : f32 to vector<8x128xf32>
    %c0_11 = arith.constant 0 : index
    %c0_12 = arith.constant 0 : index
    %36 = vector.load %arg3[%c0_11, %c0_12] : memref<8x128xf32, #tpu.memory_space<vmem>>, vector<8x128xf32>
    tpu.vector_store %arg3[%c0_11, %c0_12], %35 {strides = array<i32>} : memref<8x128xf32, #tpu.memory_space<vmem>>, vector<8x128xf32>,
    return
  }
  func.func @transform_0(%arg0: i32) -> (i32, i32) {
    %c0_i32 = arith.constant 0 : i32
    %c0_i32_0 = arith.constant 0 : i32
    return %arg0, %c0_i32 : i32, i32
  }
  func.func @transform_1(%arg0: i32) -> (i32, i32) {
    %c0_i32 = arith.constant 0 : i32
    %c0_i32_0 = arith.constant 0 : i32
    return %arg0, %c0_i32 : i32, i32
  }
  func.func @transform_2(%arg0: i32) -> (i32, i32) {
    %c0_i32 = arith.constant 0 : i32
    %c0_i32_0 = arith.constant 0 : i32
    return %arg0, %c0_i32 : i32, i32
  }
}

</mosaic_0001>

<llo_original>
// kernel: tpu_custom_call.1
$region0: #{tpu_custom_call.1}
  #allocation0 [shape = 'u32[]', space=smem, size = 0x4, offset = 0x4, fixed_abs, tag = 'smem constant byte address 0x4 - core index']
  #allocation1 [shape = 'u32[144,128]{1,0:T(1,128)}', space=vmem, size = 0x12000, scoped, tag = 'internal scratch']
  %s0 = inlined_call_operand.hbm [shape: f32[8,128], index: 0, kind: input, shape index: {}]
  %s1 = inlined_call_operand.hbm [shape: f32[8,128], index: 1, kind: input, shape index: {}]
  %s2 = inlined_call_operand.hbm [shape: f32[8,128], index: 2, kind: output, shape index: {}]
  %s3 = sld [smem:[#allocation0]]
  $region26: #{tpu_custom_call.1} parent=0
    _
  %s5 = ssub.s32 1, %s3
  %s6 = scalar_select 0, %s5, %s3
  $region1: #{tpu_custom_call.1} parent=0
    #allocation2 [shape = 'u8[4096]{0}', space=vmem, size = 0x1000, scoped, tag = 'input window, operand 0, single buffered']
    #allocation3 [shape = 's32[1]{0}', space=sflag, size = 0x4, scoped, tag = 'scoped memory for tpu_custom_call.1']
    #allocation4 [shape = 's32[1]{0}', space=sflag, size = 0x4, scoped, tag = 'scoped memory for tpu_custom_call.1']
    #allocation5 [shape = 'u8[4096]{0}', space=vmem, size = 0x1000, scoped, tag = 'input window, operand 1, single buffered']
    #allocation6 [shape = 's32[1]{0}', space=sflag, size = 0x4, scoped, tag = 'scoped memory for tpu_custom_call.1']
    #allocation7 [shape = 'u8[4096]{0}', space=vmem, size = 0x1000, scoped, tag = 'output window, operand 0, single buffered']
    %7 = vsyncpa [#allocation3], 0
    %8 = vsyncpa [#allocation6], 0
    %9 = vsyncpa [#allocation4], 0
    // Predicated region
    $region2: #{tpu_custom_call.1} parent=1 // pred_check
      _
    $region3: #{tpu_custom_call.1} parent=1 // pred_check_branch
      %11 = sbr.rel (0) target = $region5
    $region4: #{tpu_custom_call.1} parent=1 // pred_region
      %s13 = ssub.s32 128, 128
      %14 = vsyncadd [#allocation3], %s13
      %s16 = sshll.u32 [#allocation2], 4
      %s17 = int_to_ptr.vmem [resolvable:$true] %s16
      %19 = dma.hbm_to_vmem [thread:$0]  %s0, 128, %s17, [#allocation3]
    $region5: #{tpu_custom_call.1} parent=1 // pred_fallthru
      _
    // Predicated region
    $region6: #{tpu_custom_call.1} parent=1 // pred_check
      _
    $region7: #{tpu_custom_call.1} parent=1 // pred_check_branch
      %21 = sbr.rel (0) target = $region9
    $region8: #{tpu_custom_call.1} parent=1 // pred_region
      %s23 = ssub.s32 128, 128
      %24 = vsyncadd [#allocation6], %s23
      %s26 = sshll.u32 [#allocation5], 4
      %s27 = int_to_ptr.vmem [resolvable:$true] %s26
      %29 = dma.hbm_to_vmem [thread:$0]  %s1, 128, %s27, [#allocation6]
    $region9: #{tpu_custom_call.1} parent=1 // pred_fallthru
      _
    // Predicated region
    $region10: #{tpu_custom_call.1} parent=1 // pred_check
      _
    $region11: #{tpu_custom_call.1} parent=1 // pred_check_branch
      %31 = sbr.rel (0) target = $region13
    $region12: #{tpu_custom_call.1} parent=1 // pred_region
      %32 = dma.done [#allocation3], 128
    $region13: #{tpu_custom_call.1} parent=1 // pred_fallthru
      _
    // Predicated region
    $region14: #{tpu_custom_call.1} parent=1 // pred_check
      _
    $region15: #{tpu_custom_call.1} parent=1 // pred_check_branch
      %34 = sbr.rel (0) target = $region17
    $region16: #{tpu_custom_call.1} parent=1 // pred_region
      %35 = dma.done [#allocation6], 128
    $region17: #{tpu_custom_call.1} parent=1 // pred_fallthru
      _
    %v36 = vld [vmem:[#allocation2] sm:$0xff]
    %v37 = vld [vmem:[#allocation5] sm:$0xff]
    %v38 = vand.u32 2147483647, %v36
    %v39 = vsub.f32 0.0, %v38
    %v40 = vmul.f32 %v39, 1.442695
    %v41 = vpow.pop %v40
    %v42 = vadd.f32 %v41, 1.0
    %v43 = vlog2.pop %v42
    %v44 = vmul.f32 %v43, 0.6931472
    %v45 = vmul.f32 -0.5, %v41
    %v46 = vadd.f32 %v45, 1.0
    %v47 = vmul.f32 %v46, %v41
    %v48 = vand.u32 2147483647, %v41
    %vm49 = vcmp.lt.f32.partialorder %v48, 0.0004427343
    %v50 = vsel %vm49, %v47, %v44
    %v51 = vmax.f32 %v36, 0.0
    %v52 = vmul.f32 %v36, %v37
    %v53 = vsub.f32 %v51, %v52
    %v54 = vadd.f32 %v53, %v50
    %v55 = vsub.f32 0.0, %v36
    %v56 = vmul.f32 %v37, 2.0
    %v57 = vsub.f32 %v56, 1.0
    %v58 = vmul.f32 %v55, %v57
    %v59 = vmin.f32 %v58, 0.0
    %v60 = vand.u32 2147483647, %v58
    %v61 = vsub.f32 0.0, %v60
    %v62 = vmul.f32 %v61, 1.442695
    %v63 = vpow.pop %v62
    %v64 = vadd.f32 %v63, 1.0
    %v65 = vlog2.pop %v64
    %v66 = vmul.f32 %v65, 0.6931472
    %v67 = vmul.f32 -0.5, %v63
    %v68 = vadd.f32 %v67, 1.0
    %v69 = vmul.f32 %v68, %v63
    %v70 = vand.u32 2147483647, %v63
    %vm71 = vcmp.lt.f32.partialorder %v70, 0.0004427343
    %v72 = vsel %vm71, %v69, %v66
    %v73 = vsub.f32 %v59, %v72
    %v74 = vmul.f32 %v73, 2.0
    %v75 = vmul.f32 %v74, 1.442695
    %v76 = vpow.pop %v75
    %v77 = vmul.f32 %v76, %v54
    %78 = vadd.xlane.f32.xlu0 %v77
    %v79 = vpop.xlane.xlu0 %78
    %v80 = vrot.slane %v79, 4
    %v81 = vadd.f32 %v79, %v80
    %v82 = vrot.slane %v81, 2
    %v83 = vadd.f32 %v81, %v82
    %v84 = vrot.slane %v83, 1
    %v85 = vadd.f32 %v83, %v84
    %s86 = vtos %v85
    %v87 = vstv %s86
    %88 = vst [vmem:[#allocation7] sm:$0xff] %v87
    // Predicated region
    $region18: #{tpu_custom_call.1} parent=1 // pred_check
      _
    $region19: #{tpu_custom_call.1} parent=1 // pred_check_branch
      %90 = sbr.rel (0) target = $region21
    $region20: #{tpu_custom_call.1} parent=1 // pred_region
      %s92 = ssub.s32 128, 128
      %93 = vsyncadd [#allocation4], %s92
      %s95 = sshll.u32 [#allocation7], 4
      %s96 = int_to_ptr.vmem [resolvable:$true] %s95
      %98 = dma.vmem_to_hbm [thread:$0]  %s96, 128, %s2, [#allocation4]
    $region21: #{tpu_custom_call.1} parent=1 // pred_fallthru
      _
    // Predicated region
    $region22: #{tpu_custom_call.1} parent=1 // pred_check
      _
    $region23: #{tpu_custom_call.1} parent=1 // pred_check_branch
      %100 = sbr.rel (0) target = $region25
    $region24: #{tpu_custom_call.1} parent=1 // pred_region
      %101 = dma.done [#allocation4], 128
    $region25: #{tpu_custom_call.1} parent=1 // pred_fallthru
      _
    %102 = vsyncpa [#allocation3], 1
    %103 = vsyncpa [#allocation6], 1
    %104 = vsyncpa [#allocation4], 1

</llo_original>
